<compile_context>
chip_gen: v7x
topology: tpu7x:2x2x1
jax: 0.10.0
libtpu: 0.0.40
codegen_flags: <defaults>
</compile_context>

<pallas_src>
import functools

import jax
import jax.numpy as jnp
from jax.experimental import pallas as pl
from jax.experimental.pallas import tpu as pltpu

_NC_PAD = 128  # lane-dense padded class dimension


def _round_up(x, m):
    return ((x + m - 1) // m) * m


def _classifier_kernel(x_ref,
                       w1_ref, b1_ref,
                       w2_ref, b2_ref,
                       w3_ref, b3_ref,
                       wh_ref, bh_ref,
                       o_ref):
    # x arrives as f32; cast to bf16 here (hidden under the x DMA).
    x = x_ref[...].astype(jnp.bfloat16)
    # Layer 1: Linear(784 -> 128) + ReLU.  bf16 operands, f32 accumulation.
    h = jnp.dot(x, w1_ref[...], preferred_element_type=jnp.float32)
    h = jnp.maximum(h + b1_ref[...], 0.0)
    # Layer 2: Linear(128 -> 64) + ReLU.
    h = jnp.dot(h.astype(jnp.bfloat16), w2_ref[...],
                preferred_element_type=jnp.float32)
    h = jnp.maximum(h + b2_ref[...], 0.0)
    # Layer 3: Linear(64 -> 32) + ReLU.  (No padding of 64/32 dims: kernel is
    # HBM-bound; these matmuls are <7% of FLOPs.)
    h = jnp.dot(h.astype(jnp.bfloat16), w3_ref[...],
                preferred_element_type=jnp.float32)
    h = jnp.maximum(h + b3_ref[...], 0.0)
    # Head: Linear(32 -> 10) zero-padded to 128 lanes; padded bias lanes are
    # -1e30 so they contribute exp(-huge) = 0 to the softmax denominator.
    logits = jnp.dot(h.astype(jnp.bfloat16), wh_ref[...],
                     preferred_element_type=jnp.float32)
    logits = logits + bh_ref[...]
    # Numerically stable log-softmax over the class axis (EUP/XLU work, free
    # next to the DMA bottleneck).
    m = jnp.max(logits, axis=-1, keepdims=True)
    shifted = logits - m
    lse = jnp.log(jnp.sum(jnp.exp(shifted), axis=-1, keepdims=True))
    o_ref[...] = (shifted - lse).astype(o_ref.dtype)  # bf16 store, lane-dense


def prepare_params(params):
    """One-time conversion of f32 params to kernel-ready operands.

    bf16 weights (f32 biases), head weight zero-padded to 128 output lanes and
    head bias padded with -1e30 sentinels.  Do this once at init, not per call.
    """
    n_classes = params["wh"].shape[-1]
    return {
        "w1": params["w1"].astype(jnp.bfloat16),
        "b1": params["b1"],
        "w2": params["w2"].astype(jnp.bfloat16),
        "b2": params["b2"],
        "w3": params["w3"].astype(jnp.bfloat16),
        "b3": params["b3"],
        "wh_pad": jnp.pad(params["wh"].astype(jnp.bfloat16),
                          ((0, 0), (0, _NC_PAD - n_classes))),
        "bh_pad": jnp.pad(params["bh"],
                          ((0, 0), (0, _NC_PAD - n_classes)),
                          constant_values=-1e30),
    }


@functools.partial(jax.jit, static_argnames=("n_classes", "block_batch"))
def classifier_forward(x, prepared, *, n_classes=10, block_batch=2048):
    """x: (B, 784) float32.  prepared: output of prepare_params()."""
    B, F = x.shape

    # Batch tile: large by default (amortizes per-grid-step overhead), clamped
    # to the 8-aligned batch.  The ragged last block (if any) is handled by
    # Pallas' bounded read / masked store -- no full-array pad of x.
    TB = max(8, min(_round_up(block_batch, 8), _round_up(B, 8)))
    num_steps = pl.cdiv(B, TB)

    def resident(a):
        # Full-array block, same index every step -> stays resident in VMEM.
        return pl.BlockSpec(a.shape, lambda i: (0,) * a.ndim)

    if TB <= 1024 and num_steps >= 3:
        # Short per-step compute relative to the x DMA: deepen the pipeline.
        x_spec = pl.BlockSpec((TB, F), lambda i: (i, 0),
                              pipeline_mode=pl.Buffered(3))
    else:
        x_spec = pl.BlockSpec((TB, F), lambda i: (i, 0))

    weights = (prepared["w1"], prepared["b1"],
               prepared["w2"], prepared["b2"],
               prepared["w3"], prepared["b3"],
               prepared["wh_pad"], prepared["bh_pad"])

    out = pl.pallas_call(
        _classifier_kernel,
        out_shape=jax.ShapeDtypeStruct((B, _NC_PAD), jnp.bfloat16),
        grid=(num_steps,),
        in_specs=[x_spec] + [resident(a) for a in weights],
        out_specs=pl.BlockSpec((TB, _NC_PAD), lambda i: (i, 0)),
        compiler_params=pltpu.CompilerParams(
            dimension_semantics=("parallel",),
            vmem_limit_bytes=48 * 1024 * 1024,
        ),
    )(x, *weights)

    # Slice the 10 real classes; return f32 to match the module's interface.
    return out[:, :n_classes].astype(jnp.float32)


def init_params(key, channel_list=(128, 64, 32), in_features=784, n_classes=10):
    """Deterministic init mimicking torch.nn.Linear (uniform +/- 1/sqrt(fan_in))."""
    dims = [in_features] + list(channel_list)
    names = ["1", "2", "3"]
    params = {}
    keys = jax.random.split(key, 2 * (len(names) + 1))
    ki = 0
    for name, fan_in, fan_out in zip(names, dims[:-1], dims[1:]):
        bound = 1.0 / jnp.sqrt(fan_in)
        params["w" + name] = jax.random.uniform(
            keys[ki], (fan_in, fan_out), jnp.float32, -bound, bound); ki += 1
        params["b" + name] = jax.random.uniform(
            keys[ki], (1, fan_out), jnp.float32, -bound, bound); ki += 1
    bound = 1.0 / jnp.sqrt(dims[-1])
    params["wh"] = jax.random.uniform(
        keys[ki], (dims[-1], n_classes), jnp.float32, -bound, bound); ki += 1
    params["bh"] = jax.random.uniform(
        keys[ki], (1, n_classes), jnp.float32, -bound, bound)
    return params


def reference_forward_bf16(x, params):
    """Mirrors kernel precision (bf16 matmul operands, f32 acc, bf16 output)."""
    cast = lambda a: a.astype(jnp.bfloat16)
    h = jnp.dot(cast(x), cast(params["w1"]),
                preferred_element_type=jnp.float32) + params["b1"]
    h = jnp.maximum(h, 0.0)
    h = jnp.dot(cast(h), cast(params["w2"]),
                preferred_element_type=jnp.float32) + params["b2"]
    h = jnp.maximum(h, 0.0)
    h = jnp.dot(cast(h), cast(params["w3"]),
                preferred_element_type=jnp.float32) + params["b3"]
    h = jnp.maximum(h, 0.0)
    logits = jnp.dot(cast(h), cast(params["wh"]),
                     preferred_element_type=jnp.float32) + params["bh"]
    logp = jax.nn.log_softmax(logits, axis=1)
    return logp.astype(jnp.bfloat16).astype(jnp.float32)


def reference_forward_f32(x, params):
    h = jnp.maximum(x @ params["w1"] + params["b1"], 0.0)
    h = jnp.maximum(h @ params["w2"] + params["b2"], 0.0)
    h = jnp.maximum(h @ params["w3"] + params["b3"], 0.0)
    logits = h @ params["wh"] + params["bh"]
    return jax.nn.log_softmax(logits, axis=1)


if __name__ == "__main__":
    key = jax.random.PRNGKey(0)
    k_params, k_x, k_x2, k_x3 = jax.random.split(key, 4)

    params = init_params(k_params)
    prepared = prepare_params(params)

    # Small batch (single grid step).
    B = 8
    x = jax.random.normal(k_x, (B, 784), jnp.float32)
    out = jax.block_until_ready(classifier_forward(x, prepared))
    assert out.shape == (B, 10), out.shape
    ref_bf = reference_forward_bf16(x, params)
    ref_f32 = reference_forward_f32(x, params)
    err_bf = float(jnp.max(jnp.abs(out - ref_bf)))
    err_f32 = float(jnp.max(jnp.abs(out - ref_f32)))
    assert err_bf < 5e-2, err_bf    # matches bf16-precision reference
    assert err_f32 < 2e-1, err_f32  # semantic match vs f32 reference

    # Multi-step grid with a ragged last tile + Buffered(3) input pipeline.
    B2 = 40
    x2 = jax.random.normal(k_x2, (B2, 784), jnp.float32)
    out2 = jax.block_until_ready(
        classifier_forward(x2, prepared, block_batch=16))
    assert out2.shape == (B2, 10), out2.shape
    err2 = float(jnp.max(jnp.abs(out2 - reference_forward_bf16(x2, params))))
    assert err2 < 5e-2, err2

    # Batch not a multiple of 8: exercises sub-sublane masking on the final
    # block's store (no wrapper-side padding of x anywhere).
    B3 = 13
    x3 = jax.random.normal(k_x3, (B3, 784), jnp.float32)
    out3 = jax.block_until_ready(
        classifier_forward(x3, prepared, block_batch=8))
    assert out3.shape == (B3, 10), out3.shape
    err3 = float(jnp.max(jnp.abs(out3 - reference_forward_bf16(x3, params))))
    assert err3 < 5e-2, err3

    print("KERNEL_OK")
</pallas_src>

<mosaic_0001>
module attributes {stable_mosaic.version = 11 : i64} {
  func.func @_classifier_kernel(%arg0: i32, %arg1: memref<8x784xf32, #tpu.memory_space<vmem>>, %arg2: memref<784x128xbf16, #tpu.memory_space<vmem>>, %arg3: memref<1x128xf32, #tpu.memory_space<vmem>>, %arg4: memref<128x64xbf16, #tpu.memory_space<vmem>>, %arg5: memref<1x64xf32, #tpu.memory_space<vmem>>, %arg6: memref<64x32xbf16, #tpu.memory_space<vmem>>, %arg7: memref<1x32xf32, #tpu.memory_space<vmem>>, %arg8: memref<32x128xbf16, #tpu.memory_space<vmem>>, %arg9: memref<1x128xf32, #tpu.memory_space<vmem>>, %arg10: memref<8x128xbf16, #tpu.memory_space<vmem>>) attributes {dimension_semantics = [#tpu.dimension_semantics<parallel>], iteration_bounds = array<i64: 1>, scalar_prefetch = 0 : i64, scratch_operands = 0 : i64, tpu.core_type = #tpu.core_type<tc>, window_params = [{transform_indices = @transform_0, window_bounds = array<i64: 8, 784>}, {pipeline_mode = #tpu.pipeline_mode<synchronous>, transform_indices = @transform_1, window_bounds = array<i64: 784, 128>}, {pipeline_mode = #tpu.pipeline_mode<synchronous>, transform_indices = @transform_2, window_bounds = array<i64: 1, 128>}, {pipeline_mode = #tpu.pipeline_mode<synchronous>, transform_indices = @transform_3, window_bounds = array<i64: 128, 64>}, {pipeline_mode = #tpu.pipeline_mode<synchronous>, transform_indices = @transform_4, window_bounds = array<i64: 1, 64>}, {pipeline_mode = #tpu.pipeline_mode<synchronous>, transform_indices = @transform_5, window_bounds = array<i64: 64, 32>}, {pipeline_mode = #tpu.pipeline_mode<synchronous>, transform_indices = @transform_6, window_bounds = array<i64: 1, 32>}, {pipeline_mode = #tpu.pipeline_mode<synchronous>, transform_indices = @transform_7, window_bounds = array<i64: 32, 128>}, {pipeline_mode = #tpu.pipeline_mode<synchronous>, transform_indices = @transform_8, window_bounds = array<i64: 1, 128>}, {transform_indices = @transform_9, window_bounds = array<i64: 8, 128>}]} {
    %c0 = arith.constant 0 : index
    %c0_0 = arith.constant 0 : index
    %0 = vector.load %arg1[%c0, %c0_0] : memref<8x784xf32, #tpu.memory_space<vmem>>, vector<8x784xf32>
    %1 = arith.truncf %0 : vector<8x784xf32> to vector<8x784xbf16>
    %c0_1 = arith.constant 0 : index
    %c0_2 = arith.constant 0 : index
    %2 = vector.load %arg2[%c0_1, %c0_2] : memref<784x128xbf16, #tpu.memory_space<vmem>>, vector<784x128xbf16>
    %cst = arith.constant dense<0.000000e+00> : vector<8x128xf32>
    %3 = tpu.matmul %1, %2, %cst {dimension_numbers = #tpu.dot_dimension_numbers<[1], [0], [0], [1], [0, 0, 1, 1], [], []>} : vector<8x784xbf16>, vector<784x128xbf16>, vector<8x128xf32> -> vector<8x128xf32>
    %c0_3 = arith.constant 0 : index
    %c0_4 = arith.constant 0 : index
    %4 = vector.load %arg3[%c0_3, %c0_4] : memref<1x128xf32, #tpu.memory_space<vmem>>, vector<1x128xf32>
    %5 = vector.broadcast %4 : vector<1x128xf32> to vector<8x128xf32>
    %6 = arith.addf %3, %5 : vector<8x128xf32>
    %cst_5 = arith.constant 0.000000e+00 : f32
    %7 = vector.broadcast %cst_5 : f32 to vector<8x128xf32>
    %8 = arith.maximumf %6, %7 : vector<8x128xf32>
    %9 = arith.truncf %8 : vector<8x128xf32> to vector<8x128xbf16>
    %c0_6 = arith.constant 0 : index
    %c0_7 = arith.constant 0 : index
    %10 = vector.load %arg4[%c0_6, %c0_7] : memref<128x64xbf16, #tpu.memory_space<vmem>>, vector<128x64xbf16>
    %cst_8 = arith.constant dense<0.000000e+00> : vector<8x64xf32>
    %11 = tpu.matmul %9, %10, %cst_8 {dimension_numbers = #tpu.dot_dimension_numbers<[1], [0], [0], [1], [0, 0, 1, 1], [], []>} : vector<8x128xbf16>, vector<128x64xbf16>, vector<8x64xf32> -> vector<8x64xf32>
    %c0_9 = arith.constant 0 : index
    %c0_10 = arith.constant 0 : index
    %12 = vector.load %arg5[%c0_9, %c0_10] : memref<1x64xf32, #tpu.memory_space<vmem>>, vector<1x64xf32>
    %13 = vector.broadcast %12 : vector<1x64xf32> to vector<8x64xf32>
    %14 = arith.addf %11, %13 : vector<8x64xf32>
    %cst_11 = arith.constant 0.000000e+00 : f32
    %15 = vector.broadcast %cst_11 : f32 to vector<8x64xf32>
    %16 = arith.maximumf %14, %15 : vector<8x64xf32>
    %17 = arith.truncf %16 : vector<8x64xf32> to vector<8x64xbf16>
    %c0_12 = arith.constant 0 : index
    %c0_13 = arith.constant 0 : index
    %18 = vector.load %arg6[%c0_12, %c0_13] : memref<64x32xbf16, #tpu.memory_space<vmem>>, vector<64x32xbf16>
    %cst_14 = arith.constant dense<0.000000e+00> : vector<8x32xf32>
    %19 = tpu.matmul %17, %18, %cst_14 {dimension_numbers = #tpu.dot_dimension_numbers<[1], [0], [0], [1], [0, 0, 1, 1], [], []>} : vector<8x64xbf16>, vector<64x32xbf16>, vector<8x32xf32> -> vector<8x32xf32>
    %c0_15 = arith.constant 0 : index
    %c0_16 = arith.constant 0 : index
    %20 = vector.load %arg7[%c0_15, %c0_16] : memref<1x32xf32, #tpu.memory_space<vmem>>, vector<1x32xf32>
    %21 = vector.broadcast %20 : vector<1x32xf32> to vector<8x32xf32>
    %22 = arith.addf %19, %21 : vector<8x32xf32>
    %cst_17 = arith.constant 0.000000e+00 : f32
    %23 = vector.broadcast %cst_17 : f32 to vector<8x32xf32>
    %24 = arith.maximumf %22, %23 : vector<8x32xf32>
    %25 = arith.truncf %24 : vector<8x32xf32> to vector<8x32xbf16>
    %c0_18 = arith.constant 0 : index
    %c0_19 = arith.constant 0 : index
    %26 = vector.load %arg8[%c0_18, %c0_19] : memref<32x128xbf16, #tpu.memory_space<vmem>>, vector<32x128xbf16>
    %cst_20 = arith.constant dense<0.000000e+00> : vector<8x128xf32>
    %27 = tpu.matmul %25, %26, %cst_20 {dimension_numbers = #tpu.dot_dimension_numbers<[1], [0], [0], [1], [0, 0, 1, 1], [], []>} : vector<8x32xbf16>, vector<32x128xbf16>, vector<8x128xf32> -> vector<8x128xf32>
    %c0_21 = arith.constant 0 : index
    %c0_22 = arith.constant 0 : index
    %28 = vector.load %arg9[%c0_21, %c0_22] : memref<1x128xf32, #tpu.memory_space<vmem>>, vector<1x128xf32>
    %29 = vector.broadcast %28 : vector<1x128xf32> to vector<8x128xf32>
    %30 = arith.addf %27, %29 : vector<8x128xf32>
    %cst_23 = arith.constant dense<0xFF800000> : vector<8xf32>
    %31 = vector.multi_reduction <maximumf>, %30, %cst_23 [1] : vector<8x128xf32> to vector<8xf32>
    %32 = vector.shape_cast %31 : vector<8xf32> to vector<8x1xf32>
    %33 = vector.broadcast %32 : vector<8x1xf32> to vector<8x128xf32>
    %34 = arith.subf %30, %33 : vector<8x128xf32>
    %35 = math.exp %34 : vector<8x128xf32>
    %cst_24 = arith.constant dense<0.000000e+00> : vector<8xf32>
    %36 = vector.multi_reduction <add>, %35, %cst_24 [1] : vector<8x128xf32> to vector<8xf32>
    %37 = vector.shape_cast %36 : vector<8xf32> to vector<8x1xf32>
    %38 = math.log %37 : vector<8x1xf32>
    %39 = vector.broadcast %38 : vector<8x1xf32> to vector<8x128xf32>
    %40 = arith.subf %34, %39 : vector<8x128xf32>
    %41 = arith.truncf %40 : vector<8x128xf32> to vector<8x128xbf16>
    %c0_25 = arith.constant 0 : index
    %c0_26 = arith.constant 0 : index
    %42 = vector.load %arg10[%c0_25, %c0_26] : memref<8x128xbf16, #tpu.memory_space<vmem>>, vector<8x128xbf16>
    tpu.vector_store %arg10[%c0_25, %c0_26], %41 {strides = array<i32>} : memref<8x128xbf16, #tpu.memory_space<vmem>>, vector<8x128xbf16>,
    return
  }
  func.func @transform_0(%arg0: i32) -> (i32, i32) {
    %c0_i32 = arith.constant 0 : i32
    %c0_i32_0 = arith.constant 0 : i32
    return %arg0, %c0_i32 : i32, i32
  }
  func.func @transform_1(%arg0: i32) -> (i32, i32) {
    %c0_i32 = arith.constant 0 : i32
    %c0_i32_0 = arith.constant 0 : i32
    %c0_i32_1 = arith.constant 0 : i32
    return %c0_i32, %c0_i32_0 : i32, i32
  }
  func.func @transform_2(%arg0: i32) -> (i32, i32) {
    %c0_i32 = arith.constant 0 : i32
    %c0_i32_0 = arith.constant 0 : i32
    %c0_i32_1 = arith.constant 0 : i32
    return %c0_i32, %c0_i32_0 : i32, i32
  }
  func.func @transform_3(%arg0: i32) -> (i32, i32) {
    %c0_i32 = arith.constant 0 : i32
    %c0_i32_0 = arith.constant 0 : i32
    %c0_i32_1 = arith.constant 0 : i32
    return %c0_i32, %c0_i32_0 : i32, i32
  }
  func.func @transform_4(%arg0: i32) -> (i32, i32) {
    %c0_i32 = arith.constant 0 : i32
    %c0_i32_0 = arith.constant 0 : i32
    %c0_i32_1 = arith.constant 0 : i32
    return %c0_i32, %c0_i32_0 : i32, i32
  }
  func.func @transform_5(%arg0: i32) -> (i32, i32) {
    %c0_i32 = arith.constant 0 : i32
    %c0_i32_0 = arith.constant 0 : i32
    %c0_i32_1 = arith.constant 0 : i32
    return %c0_i32, %c0_i32_0 : i32, i32
  }
  func.func @transform_6(%arg0: i32) -> (i32, i32) {
    %c0_i32 = arith.constant 0 : i32
    %c0_i32_0 = arith.constant 0 : i32
    %c0_i32_1 = arith.constant 0 : i32
    return %c0_i32, %c0_i32_0 : i32, i32
  }
  func.func @transform_7(%arg0: i32) -> (i32, i32) {
    %c0_i32 = arith.constant 0 : i32
    %c0_i32_0 = arith.constant 0 : i32
    %c0_i32_1 = arith.constant 0 : i32
    return %c0_i32, %c0_i32_0 : i32, i32
  }
  func.func @transform_8(%arg0: i32) -> (i32, i32) {
    %c0_i32 = arith.constant 0 : i32
    %c0_i32_0 = arith.constant 0 : i32
    %c0_i32_1 = arith.constant 0 : i32
    return %c0_i32, %c0_i32_0 : i32, i32
  }
  func.func @transform_9(%arg0: i32) -> (i32, i32) {
    %c0_i32 = arith.constant 0 : i32
    %c0_i32_0 = arith.constant 0 : i32
    return %arg0, %c0_i32 : i32, i32
  }
}

</mosaic_0001>

<llo_original>
// kernel: classifier_forward.1
$region0: #{classifier_forward.1}
  #allocation0 [shape = 'u32[]', space=smem, size = 0x4, offset = 0x4, fixed_abs, tag = 'smem constant byte address 0x4 - core index']
  #allocation1 [shape = 'u32[144,128]{1,0:T(1,128)}', space=vmem, size = 0x12000, scoped, tag = 'internal scratch']
  %s0 = inlined_call_operand.vmem [shape: f32[8,784], index: 0, kind: input, shape index: {}]
  %s1 = inlined_call_operand.hbm [shape: bf16[784,128], index: 1, kind: input, shape index: {}]
  %s2 = inlined_call_operand.vmem [shape: f32[1,128], index: 2, kind: input, shape index: {}]
  %s3 = inlined_call_operand.vmem [shape: bf16[128,64], index: 3, kind: input, shape index: {}]
  %s4 = inlined_call_operand.vmem [shape: f32[1,64], index: 4, kind: input, shape index: {}]
  %s5 = inlined_call_operand.vmem [shape: bf16[64,32], index: 5, kind: input, shape index: {}]
  %s6 = inlined_call_operand.vmem [shape: f32[1,32], index: 6, kind: input, shape index: {}]
  %s7 = inlined_call_operand.vmem [shape: bf16[32,128], index: 7, kind: input, shape index: {}]
  %s8 = inlined_call_operand.vmem [shape: f32[1,128], index: 8, kind: input, shape index: {}]
  %s9 = inlined_call_operand.vmem [shape: bf16[8,128], index: 9, kind: output, shape index: {}]
  %s10 = sld [smem:[#allocation0]]
  $region50: #{classifier_forward.1} parent=0
    _
  %s12 = ssub.s32 1, %s10
  %s13 = scalar_select 0, %s12, %s10
  $region1: #{classifier_forward.1} parent=0
    #allocation2 [shape = 'u8[200704]{0}', space=vmem, size = 0x31000, scoped, tag = 'input window, operand 1, single buffered']
    #allocation3 [shape = 's32[1]{0}', space=sflag, size = 0x4, scoped, tag = 'scoped memory for classifier_forward.1']
    %14 = vsyncpa [#allocation3], 0
    // Predicated region
    $region2: #{classifier_forward.1} parent=1 // pred_check
      _
    $region3: #{classifier_forward.1} parent=1 // pred_check_branch
      %16 = sbr.rel (0) target = $region5
    $region4: #{classifier_forward.1} parent=1 // pred_region
      _
    $region5: #{classifier_forward.1} parent=1 // pred_fallthru
      _
    // Predicated region
    $region6: #{classifier_forward.1} parent=1 // pred_check
      _
    $region7: #{classifier_forward.1} parent=1 // pred_check_branch
      %18 = sbr.rel (0) target = $region9
    $region8: #{classifier_forward.1} parent=1 // pred_region
      %s20 = ssub.s32 6272, 6272
      %21 = vsyncadd [#allocation3], %s20
      %s22 = sshll.u32 [#allocation2], 4
      %s23 = int_to_ptr.vmem [resolvable:$true] %s22
      %28 = dma.hbm_to_vmem [thread:$0]  %s1, 6272, %s23, [#allocation3], 64, 64, 4
    $region9: #{classifier_forward.1} parent=1 // pred_fallthru
      _
    // Predicated region
    $region10: #{classifier_forward.1} parent=1 // pred_check
      _
    $region11: #{classifier_forward.1} parent=1 // pred_check_branch
      %30 = sbr.rel (0) target = $region13
    $region12: #{classifier_forward.1} parent=1 // pred_region
      _
    $region13: #{classifier_forward.1} parent=1 // pred_fallthru
      _
    // Predicated region
    $region14: #{classifier_forward.1} parent=1 // pred_check
      _
    $region15: #{classifier_forward.1} parent=1 // pred_check_branch
      %32 = sbr.rel (0) target = $region17
    $region16: #{classifier_forward.1} parent=1 // pred_region
      _
    $region17: #{classifier_forward.1} parent=1 // pred_fallthru
      _
    // Predicated region
    $region18: #{classifier_forward.1} parent=1 // pred_check
      _
    $region19: #{classifier_forward.1} parent=1 // pred_check_branch
      %34 = sbr.rel (0) target = $region21
    $region20: #{classifier_forward.1} parent=1 // pred_region
      _
    $region21: #{classifier_forward.1} parent=1 // pred_fallthru
      _
    // Predicated region
    $region22: #{classifier_forward.1} parent=1 // pred_check
      _
    $region23: #{classifier_forward.1} parent=1 // pred_check_branch
      %36 = sbr.rel (0) target = $region25
    $region24: #{classifier_forward.1} parent=1 // pred_region
      _
    $region25: #{classifier_forward.1} parent=1 // pred_fallthru
      _
    // Predicated region
    $region26: #{classifier_forward.1} parent=1 // pred_check
      _
    $region27: #{classifier_forward.1} parent=1 // pred_check_branch
      %38 = sbr.rel (0) target = $region29
    $region28: #{classifier_forward.1} parent=1 // pred_region
      _
    $region29: #{classifier_forward.1} parent=1 // pred_fallthru
      _
    // Predicated region
    $region30: #{classifier_forward.1} parent=1 // pred_check
      _
    $region31: #{classifier_forward.1} parent=1 // pred_check_branch
      %40 = sbr.rel (0) target = $region33
    $region32: #{classifier_forward.1} parent=1 // pred_region
      _
    $region33: #{classifier_forward.1} parent=1 // pred_fallthru
      _
    // Predicated region
    $region34: #{classifier_forward.1} parent=1 // pred_check
      _
    $region35: #{classifier_forward.1} parent=1 // pred_check_branch
      %42 = sbr.rel (0) target = $region37
    $region36: #{classifier_forward.1} parent=1 // pred_region
      _
    $region37: #{classifier_forward.1} parent=1 // pred_fallthru
      _
    // Predicated region
    $region38: #{classifier_forward.1} parent=1 // pred_check
      _
    $region39: #{classifier_forward.1} parent=1 // pred_check_branch
      %44 = sbr.rel (0) target = $region41
    $region40: #{classifier_forward.1} parent=1 // pred_region
      %45 = dma.done [#allocation3], 6272
    $region41: #{classifier_forward.1} parent=1 // pred_fallthru
      _
    %v47 = vld [vmem:[%s0] sm:$0xff]
    %v48 = vld [vmem:[%s0 + $0x8] sm:$0xff]
    %v49 = vld [vmem:[%s0 + $0x10] sm:$0xff]
    %v50 = vld [vmem:[%s0 + $0x18] sm:$0xff]
    %v51 = vld [vmem:[%s0 + $0x20] sm:$0xff]
    %v52 = vld [vmem:[%s0 + $0x28] sm:$0xff]
    %v53 = vld [vmem:[%s0 + $0x30] sm:$0xff]
    %v54 = vpack.c.bf16 %v47, %v47
    %v55 = vpack.c.bf16 %v48, %v48
    %v56 = vpack.c.bf16 %v49, %v49
    %v57 = vpack.c.bf16 %v50, %v50
    %v58 = vpack.c.bf16 %v51, %v51
    %v59 = vpack.c.bf16 %v52, %v52
    %v60 = vpack.c.bf16 %v53, %v53
    %v61 = vld [vmem:[#allocation2] sm:$0xf]
    %v62 = vld [vmem:[#allocation2 + $0x4] sm:$0xf]
    %v63 = vld [vmem:[#allocation2 + $0x8] sm:$0xf]
    %v64 = vld [vmem:[#allocation2 + $0xc] sm:$0xf]
    %v65 = vld [vmem:[#allocation2 + $0x10] sm:$0xf]
    %v66 = vld [vmem:[#allocation2 + $0x14] sm:$0xf]
    %v67 = vld [vmem:[#allocation2 + $0x18] sm:$0xf]
    %v68 = vld [vmem:[#allocation2 + $0x1c] sm:$0xf]
    %v69 = vld [vmem:[#allocation2 + $0x20] sm:$0xf]
    %v70 = vld [vmem:[#allocation2 + $0x24] sm:$0xf]
    %v71 = vld [vmem:[#allocation2 + $0x28] sm:$0xf]
    %v72 = vld [vmem:[#allocation2 + $0x2c] sm:$0xf]
    %v73 = vld [vmem:[#allocation2 + $0x30] sm:$0xf]
    %v74 = vld [vmem:[#allocation2 + $0x34] sm:$0xf]
    %v75 = vld [vmem:[#allocation2 + $0x38] sm:$0xf]
    %v76 = vld [vmem:[#allocation2 + $0x3c] sm:$0xf]
    %v77 = vld [vmem:[#allocation2 + $0x40] sm:$0xf]
    %v78 = vld [vmem:[#allocation2 + $0x44] sm:$0xf]
    %v79 = vld [vmem:[#allocation2 + $0x48] sm:$0xf]
    %v80 = vld [vmem:[#allocation2 + $0x4c] sm:$0xf]
    %v81 = vld [vmem:[#allocation2 + $0x50] sm:$0xf]
    %v82 = vld [vmem:[#allocation2 + $0x54] sm:$0xf]
    %v83 = vld [vmem:[#allocation2 + $0x58] sm:$0xf]
    %v84 = vld [vmem:[#allocation2 + $0x5c] sm:$0xf]
    %v85 = vld [vmem:[#allocation2 + $0x60] sm:$0xf]
    %v86 = vld [vmem:[#allocation2 + $0x64] sm:$0xf]
    %v87 = vld [vmem:[#allocation2 + $0x68] sm:$0xf]
    %v88 = vld [vmem:[#allocation2 + $0x6c] sm:$0xf]
    %v89 = vld [vmem:[#allocation2 + $0x70] sm:$0xf]
    %v90 = vld [vmem:[#allocation2 + $0x74] sm:$0xf]
    %v91 = vld [vmem:[#allocation2 + $0x78] sm:$0xf]
    %v92 = vld [vmem:[#allocation2 + $0x7c] sm:$0xf]
    %v93 = vld [vmem:[#allocation2 + $0x80] sm:$0xf]
    %v94 = vld [vmem:[#allocation2 + $0x84] sm:$0xf]
    %v95 = vld [vmem:[#allocation2 + $0x88] sm:$0xf]
    %v96 = vld [vmem:[#allocation2 + $0x8c] sm:$0xf]
    %v97 = vld [vmem:[#allocation2 + $0x90] sm:$0xf]
    %v98 = vld [vmem:[#allocation2 + $0x94] sm:$0xf]
    %v99 = vld [vmem:[#allocation2 + $0x98] sm:$0xf]
    %v100 = vld [vmem:[#allocation2 + $0x9c] sm:$0xf]
    %v101 = vld [vmem:[#allocation2 + $0xa0] sm:$0xf]
    %v102 = vld [vmem:[#allocation2 + $0xa4] sm:$0xf]
    %v103 = vld [vmem:[#allocation2 + $0xa8] sm:$0xf]
    %v104 = vld [vmem:[#allocation2 + $0xac] sm:$0xf]
    %v105 = vld [vmem:[#allocation2 + $0xb0] sm:$0xf]
    %v106 = vld [vmem:[#allocation2 + $0xb4] sm:$0xf]
    %v107 = vld [vmem:[#allocation2 + $0xb8] sm:$0xf]
    %v108 = vld [vmem:[#allocation2 + $0xbc] sm:$0xf]
    %v109 = vld [vmem:[#allocation2 + $0xc0] sm:$0xf]
    %v110 = vld [vmem:[#allocation2 + $0xc4] sm:$0xf]
    %v111 = vld [vmem:[#allocation2 + $0xc8] sm:$0xf]
    %v112 = vld [vmem:[#allocation2 + $0xcc] sm:$0xf]
    %v113 = vld [vmem:[#allocation2 + $0xd0] sm:$0xf]
    %v114 = vld [vmem:[#allocation2 + $0xd4] sm:$0xf]
    %v115 = vld [vmem:[#allocation2 + $0xd8] sm:$0xf]
    %v116 = vld [vmem:[#allocation2 + $0xdc] sm:$0xf]
    %v117 = vld [vmem:[#allocation2 + $0xe0] sm:$0xf]
    %v118 = vld [vmem:[#allocation2 + $0xe4] sm:$0xf]
    %v119 = vld [vmem:[#allocation2 + $0xe8] sm:$0xf]
    %v120 = vld [vmem:[#allocation2 + $0xec] sm:$0xf]
    %v121 = vld [vmem:[#allocation2 + $0xf0] sm:$0xf]
    %v122 = vld [vmem:[#allocation2 + $0xf4] sm:$0xf]
    %v123 = vld [vmem:[#allocation2 + $0xf8] sm:$0xf]
    %v124 = vld [vmem:[#allocation2 + $0xfc] sm:$0xf]
    %v125 = vld [vmem:[#allocation2 + $0x100] sm:$0xf]
    %v126 = vld [vmem:[#allocation2 + $0x104] sm:$0xf]
    %v127 = vld [vmem:[#allocation2 + $0x108] sm:$0xf]
    %v128 = vld [vmem:[#allocation2 + $0x10c] sm:$0xf]
    %v129 = vld [vmem:[#allocation2 + $0x110] sm:$0xf]
    %v130 = vld [vmem:[#allocation2 + $0x114] sm:$0xf]
    %v131 = vld [vmem:[#allocation2 + $0x118] sm:$0xf]
    %v132 = vld [vmem:[#allocation2 + $0x11c] sm:$0xf]
    %v133 = vld [vmem:[#allocation2 + $0x120] sm:$0xf]
    %v134 = vld [vmem:[#allocation2 + $0x124] sm:$0xf]
    %v135 = vld [vmem:[#allocation2 + $0x128] sm:$0xf]
    %v136 = vld [vmem:[#allocation2 + $0x12c] sm:$0xf]
    %v137 = vld [vmem:[#allocation2 + $0x130] sm:$0xf]
    %v138 = vld [vmem:[#allocation2 + $0x134] sm:$0xf]
    %v139 = vld [vmem:[#allocation2 + $0x138] sm:$0xf]
    %v140 = vld [vmem:[#allocation2 + $0x13c] sm:$0xf]
    %v141 = vld [vmem:[#allocation2 + $0x140] sm:$0xf]
    %v142 = vld [vmem:[#allocation2 + $0x144] sm:$0xf]
    %v143 = vld [vmem:[#allocation2 + $0x148] sm:$0xf]
    %v144 = vld [vmem:[#allocation2 + $0x14c] sm:$0xf]
    %v145 = vld [vmem:[#allocation2 + $0x150] sm:$0xf]
    %v146 = vld [vmem:[#allocation2 + $0x154] sm:$0xf]
    %v147 = vld [vmem:[#allocation2 + $0x158] sm:$0xf]
    %v148 = vld [vmem:[#allocation2 + $0x15c] sm:$0xf]
    %v149 = vld [vmem:[#allocation2 + $0x160] sm:$0xf]
    %v150 = vld [vmem:[#allocation2 + $0x164] sm:$0xf]
    %v151 = vld [vmem:[#allocation2 + $0x168] sm:$0xf]
    %v152 = vld [vmem:[#allocation2 + $0x16c] sm:$0xf]
    %v153 = vld [vmem:[#allocation2 + $0x170] sm:$0xf]
    %v154 = vld [vmem:[#allocation2 + $0x174] sm:$0xf]
    %v155 = vld [vmem:[#allocation2 + $0x178] sm:$0xf]
    %v156 = vld [vmem:[#allocation2 + $0x17c] sm:$0xf]
    %v157 = vld [vmem:[#allocation2 + $0x180] sm:$0xf]
    %v158 = vld [vmem:[#allocation2 + $0x184] sm:$0xf]
    %v159 = vld [vmem:[%s2] sm:$0x1]
    %v161 = vlaneseq
    %v162 = vshrl.u32 %v161, 7
    %v163 = vsub.s32 0, %v162
    %v164 = vrot.slane %v159, %v163
    %v264 = vunpack.c.l.b16 %v61
    %v265 = vunpack.c.l.b16 %v62
    %v266 = vunpack.c.l.b16 %v63
    %v267 = vunpack.c.l.b16 %v64
    %v268 = vunpack.c.l.b16 %v65
    %v269 = vunpack.c.l.b16 %v66
    %v270 = vunpack.c.l.b16 %v67
    %v271 = vunpack.c.l.b16 %v68
    %v272 = vunpack.c.l.b16 %v69
    %v273 = vunpack.c.l.b16 %v70
    %v274 = vunpack.c.l.b16 %v71
    %v275 = vunpack.c.l.b16 %v72
    %v276 = vunpack.c.l.b16 %v73
    %v277 = vunpack.c.l.b16 %v74
    %v278 = vunpack.c.l.b16 %v75
    %v279 = vunpack.c.l.b16 %v76
    %v280 = vunpack.c.l.b16 %v77
    %v281 = vunpack.c.l.b16 %v78
    %v282 = vunpack.c.l.b16 %v79
    %v283 = vunpack.c.l.b16 %v80
    %v284 = vunpack.c.l.b16 %v81
    %v285 = vunpack.c.l.b16 %v82
    %v286 = vunpack.c.l.b16 %v83
    %v287 = vunpack.c.l.b16 %v84
    %v288 = vunpack.c.l.b16 %v85
    %v289 = vunpack.c.l.b16 %v86
    %v290 = vunpack.c.l.b16 %v87
    %v291 = vunpack.c.l.b16 %v88
    %v292 = vunpack.c.l.b16 %v89
    %v293 = vunpack.c.l.b16 %v90
    %v294 = vunpack.c.l.b16 %v91
    %v295 = vunpack.c.l.b16 %v92
    %v296 = vunpack.c.l.b16 %v93
    %v297 = vunpack.c.l.b16 %v94
    %v298 = vunpack.c.l.b16 %v95
    %v299 = vunpack.c.l.b16 %v96
    %v300 = vunpack.c.l.b16 %v97
    %v301 = vunpack.c.l.b16 %v98
    %v302 = vunpack.c.l.b16 %v99
    %v303 = vunpack.c.l.b16 %v100
    %v304 = vunpack.c.l.b16 %v101
    %v305 = vunpack.c.l.b16 %v102
    %v306 = vunpack.c.l.b16 %v103
    %v307 = vunpack.c.l.b16 %v104
    %v308 = vunpack.c.l.b16 %v105
    %v309 = vunpack.c.l.b16 %v106
    %v310 = vunpack.c.l.b16 %v107
    %v311 = vunpack.c.l.b16 %v108
    %v312 = vunpack.c.l.b16 %v109
    %v313 = vunpack.c.l.b16 %v110
    %v314 = vunpack.c.l.b16 %v111
    %v315 = vunpack.c.l.b16 %v112
    %v316 = vunpack.c.l.b16 %v113
    %v317 = vunpack.c.l.b16 %v114
    %v318 = vunpack.c.l.b16 %v115
    %v319 = vunpack.c.l.b16 %v116
    %v320 = vunpack.c.l.b16 %v117
    %v321 = vunpack.c.l.b16 %v118
    %v322 = vunpack.c.l.b16 %v119
    %v323 = vunpack.c.l.b16 %v120
    %v324 = vunpack.c.l.b16 %v121
    %v325 = vunpack.c.l.b16 %v122
    %v326 = vunpack.c.l.b16 %v123
    %v327 = vunpack.c.l.b16 %v124
    %v328 = vunpack.c.l.b16 %v125
    %v329 = vunpack.c.l.b16 %v126
    %v330 = vunpack.c.l.b16 %v127
    %v331 = vunpack.c.l.b16 %v128
    %v332 = vunpack.c.l.b16 %v129
    %v333 = vunpack.c.l.b16 %v130
    %v334 = vunpack.c.l.b16 %v131
    %v335 = vunpack.c.l.b16 %v132
    %v336 = vunpack.c.l.b16 %v133
    %v337 = vunpack.c.l.b16 %v134
    %v338 = vunpack.c.l.b16 %v135
    %v339 = vunpack.c.l.b16 %v136
    %v340 = vunpack.c.l.b16 %v137
    %v341 = vunpack.c.l.b16 %v138
    %v342 = vunpack.c.l.b16 %v139
    %v343 = vunpack.c.l.b16 %v140
    %v344 = vunpack.c.l.b16 %v141
    %v345 = vunpack.c.l.b16 %v142
    %v346 = vunpack.c.l.b16 %v143
    %v347 = vunpack.c.l.b16 %v144
    %v348 = vunpack.c.l.b16 %v145
    %v349 = vunpack.c.l.b16 %v146
    %v350 = vunpack.c.l.b16 %v147
    %v351 = vunpack.c.l.b16 %v148
    %v352 = vunpack.c.l.b16 %v149
    %v353 = vunpack.c.l.b16 %v150
    %v354 = vunpack.c.l.b16 %v151
    %v355 = vunpack.c.l.b16 %v152
    %v356 = vunpack.c.l.b16 %v153
    %v357 = vunpack.c.l.b16 %v154
    %v358 = vunpack.c.l.b16 %v155
    %v359 = vunpack.c.l.b16 %v156
    %v360 = vunpack.c.l.b16 %v157
    %v361 = vunpack.c.l.b16 %v158
    %v362 = vpack.c.b16 %v265, %v264
    %v363 = vpack.c.b16 %v267, %v266
    %v364 = vpack.c.b16 %v269, %v268
    %v365 = vpack.c.b16 %v271, %v270
    %v366 = vpack.c.b16 %v273, %v272
    %v367 = vpack.c.b16 %v275, %v274
    %v368 = vpack.c.b16 %v277, %v276
    %v369 = vpack.c.b16 %v279, %v278
    %v370 = vpack.c.b16 %v281, %v280
    %v371 = vpack.c.b16 %v283, %v282
    %v372 = vpack.c.b16 %v285, %v284
    %v373 = vpack.c.b16 %v287, %v286
    %v374 = vpack.c.b16 %v289, %v288
    %v375 = vpack.c.b16 %v291, %v290
    %v376 = vpack.c.b16 %v293, %v292
    %v377 = vpack.c.b16 %v295, %v294
    %v378 = vpack.c.b16 %v297, %v296
    %v379 = vpack.c.b16 %v299, %v298
    %v380 = vpack.c.b16 %v301, %v300
    %v381 = vpack.c.b16 %v303, %v302
    %v382 = vpack.c.b16 %v305, %v304
    %v383 = vpack.c.b16 %v307, %v306
    %v384 = vpack.c.b16 %v309, %v308
    %v385 = vpack.c.b16 %v311, %v310
    %v386 = vpack.c.b16 %v313, %v312
    %v387 = vpack.c.b16 %v315, %v314
    %v388 = vpack.c.b16 %v317, %v316
    %v389 = vpack.c.b16 %v319, %v318
    %v390 = vpack.c.b16 %v321, %v320
    %v391 = vpack.c.b16 %v323, %v322
    %v392 = vpack.c.b16 %v325, %v324
    %v393 = vpack.c.b16 %v327, %v326
    %v394 = vpack.c.b16 %v329, %v328
    %v395 = vpack.c.b16 %v331, %v330
    %v396 = vpack.c.b16 %v333, %v332
    %v397 = vpack.c.b16 %v335, %v334
    %v398 = vpack.c.b16 %v337, %v336
    %v399 = vpack.c.b16 %v339, %v338
    %v400 = vpack.c.b16 %v341, %v340
    %v401 = vpack.c.b16 %v343, %v342
    %v402 = vpack.c.b16 %v345, %v344
    %v403 = vpack.c.b16 %v347, %v346
    %v404 = vpack.c.b16 %v349, %v348
    %v405 = vpack.c.b16 %v351, %v350
    %v406 = vpack.c.b16 %v353, %v352
    %v407 = vpack.c.b16 %v355, %v354
    %v408 = vpack.c.b16 %v357, %v356
    %v409 = vpack.c.b16 %v359, %v358
    %v410 = vpack.c.b16 %v361, %v360
    %vm460 = vcmask 130048
    %v462 = vsel %vm460, %v60, 0
    %464 = vmatprep.subr.bf16.mxu0 0
    %465 = vmatpush1.bf16.msra.mxu0 %v362
    %466 = vmatprep.subr.bf16.mxu0 0
    %467 = vmatpush1.bf16.msra.mxu0 %v363
    %468 = vmatprep.subr.bf16.mxu0 0
    %469 = vmatpush1.bf16.msra.mxu0 %v364
    %470 = vmatprep.subr.bf16.mxu0 0
    %471 = vmatpush1.bf16.msra.mxu0 %v365
    %472 = vmatprep.subr.bf16.mxu0 0
    %473 = vmatpush1.bf16.msra.mxu0 %v366
    %474 = vmatprep.subr.bf16.mxu0 0
    %475 = vmatpush1.bf16.msra.mxu0 %v367
    %476 = vmatprep.subr.bf16.mxu0 0
    %477 = vmatpush1.bf16.msra.mxu0 %v368
    %478 = vmatprep.subr.bf16.mxu0 0
    %479 = vmatpush1.bf16.msra.mxu0 %v369
    %480 = vmatprep.subr.bf16.mxu0 0
    %481 = vmatpush1.bf16.msra.mxu0 %v370
    %482 = vmatprep.subr.bf16.mxu0 0
    %483 = vmatpush1.bf16.msra.mxu0 %v371
    %484 = vmatprep.subr.bf16.mxu0 0
    %485 = vmatpush1.bf16.msra.mxu0 %v372
    %486 = vmatprep.subr.bf16.mxu0 0
    %487 = vmatpush1.bf16.msra.mxu0 %v373
    %488 = vmatprep.subr.bf16.mxu0 0
    %489 = vmatpush1.bf16.msra.mxu0 %v374
    %490 = vmatprep.subr.bf16.mxu0 0
    %491 = vmatpush1.bf16.msra.mxu0 %v375
    %492 = vmatprep.subr.bf16.mxu0 0
    %493 = vmatpush1.bf16.msra.mxu0 %v376
    %494 = vmatprep.subr.bf16.mxu0 0
    %495 = vmatpush1.bf16.msra.mxu0 %v377
    %496 = vmatprep.mubr.bf16.mxu0 %v55
    %497 = vmatmul.mubr.bf16.gmra.mrb[0].mxu0 %v54
    %v498 = vpop.f32.mrb[0].mxu0
    %v499 = vadd.f32 %v164, %v498
    %v500 = vpop.f32.mrb[0].mxu0
    %v501 = vpop.f32.mrb[0].mxu0
    %v502 = vpop.f32.mrb[0].mxu0
    %503 = vdwg.mxu0
    %504 = vmatprep.subr.bf16.mxu0 0
    %505 = vmatpush1.bf16.msra.mxu0 %v378
    %506 = vmatprep.subr.bf16.mxu0 0
    %507 = vmatpush1.bf16.msra.mxu0 %v379
    %508 = vmatprep.subr.bf16.mxu0 0
    %509 = vmatpush1.bf16.msra.mxu0 %v380
    %510 = vmatprep.subr.bf16.mxu0 0
    %511 = vmatpush1.bf16.msra.mxu0 %v381
    %512 = vmatprep.subr.bf16.mxu0 0
    %513 = vmatpush1.bf16.msra.mxu0 %v382
    %514 = vmatprep.subr.bf16.mxu0 0
    %515 = vmatpush1.bf16.msra.mxu0 %v383
    %516 = vmatprep.subr.bf16.mxu0 0
    %517 = vmatpush1.bf16.msra.mxu0 %v384
    %518 = vmatprep.subr.bf16.mxu0 0
    %519 = vmatpush1.bf16.msra.mxu0 %v385
    %520 = vmatprep.subr.bf16.mxu0 0
    %521 = vmatpush1.bf16.msra.mxu0 %v386
    %522 = vmatprep.subr.bf16.mxu0 0
    %523 = vmatpush1.bf16.msra.mxu0 %v387
    %524 = vmatprep.subr.bf16.mxu0 0
    %525 = vmatpush1.bf16.msra.mxu0 %v388
    %526 = vmatprep.subr.bf16.mxu0 0
    %527 = vmatpush1.bf16.msra.mxu0 %v389
    %528 = vmatprep.subr.bf16.mxu0 0
    %529 = vmatpush1.bf16.msra.mxu0 %v390
    %530 = vmatprep.subr.bf16.mxu0 0
    %531 = vmatpush1.bf16.msra.mxu0 %v391
    %532 = vmatprep.subr.bf16.mxu0 0
    %533 = vmatpush1.bf16.msra.mxu0 %v392
    %534 = vmatprep.subr.bf16.mxu0 0
    %535 = vmatpush1.bf16.msra.mxu0 %v393
    %536 = vmatprep.mubr.bf16.mxu0 %v57
    %537 = vmatmul.mubr.bf16.gmra.mrb[0].mxu0 %v56
    %v538 = vpop.f32.mrb[0].mxu0
    %v539 = vadd.f32 %v499, %v538
    %v540 = vpop.f32.mrb[0].mxu0
    %v541 = vpop.f32.mrb[0].mxu0
    %v542 = vpop.f32.mrb[0].mxu0
    %543 = vdwg.mxu0
    %544 = vmatprep.subr.bf16.mxu0 0
    %545 = vmatpush1.bf16.msra.mxu0 %v394
    %546 = vmatprep.subr.bf16.mxu0 0
    %547 = vmatpush1.bf16.msra.mxu0 %v395
    %548 = vmatprep.subr.bf16.mxu0 0
    %549 = vmatpush1.bf16.msra.mxu0 %v396
    %550 = vmatprep.subr.bf16.mxu0 0
    %551 = vmatpush1.bf16.msra.mxu0 %v397
    %552 = vmatprep.subr.bf16.mxu0 0
    %553 = vmatpush1.bf16.msra.mxu0 %v398
    %554 = vmatprep.subr.bf16.mxu0 0
    %555 = vmatpush1.bf16.msra.mxu0 %v399
    %556 = vmatprep.subr.bf16.mxu0 0
    %557 = vmatpush1.bf16.msra.mxu0 %v400
    %558 = vmatprep.subr.bf16.mxu0 0
    %559 = vmatpush1.bf16.msra.mxu0 %v401
    %560 = vmatprep.subr.bf16.mxu0 0
    %561 = vmatpush1.bf16.msra.mxu0 %v402
    %562 = vmatprep.subr.bf16.mxu0 0
    %563 = vmatpush1.bf16.msra.mxu0 %v403
    %564 = vmatprep.subr.bf16.mxu0 0
    %565 = vmatpush1.bf16.msra.mxu0 %v404
    %566 = vmatprep.subr.bf16.mxu0 0
    %567 = vmatpush1.bf16.msra.mxu0 %v405
    %568 = vmatprep.subr.bf16.mxu0 0
    %569 = vmatpush1.bf16.msra.mxu0 %v406
    %570 = vmatprep.subr.bf16.mxu0 0
    %571 = vmatpush1.bf16.msra.mxu0 %v407
    %572 = vmatprep.subr.bf16.mxu0 0
    %573 = vmatpush1.bf16.msra.mxu0 %v408
    %574 = vmatprep.subr.bf16.mxu0 0
    %575 = vmatpush1.bf16.msra.mxu0 %v409
    %576 = vmatprep.mubr.bf16.mxu0 %v59
    %577 = vmatmul.mubr.bf16.gmra.mrb[0].mxu0 %v58
    %v578 = vpop.f32.mrb[0].mxu0
    %v579 = vadd.f32 %v539, %v578
    %v580 = vpop.f32.mrb[0].mxu0
    %v581 = vpop.f32.mrb[0].mxu0
    %v582 = vpop.f32.mrb[0].mxu0
    %583 = vdwg.mxu0
    %584 = vmatprep.subr.bf16.mxu0 0
    %585 = vmatpush1.bf16.msra.mxu0 %v410
    %586 = vmatprep.subr.bf16.mxu0 0
    %587 = vmatpush1.bf16.msra.mxu0 0
    %588 = vmatprep.subr.bf16.mxu0 0
    %589 = vmatpush1.bf16.msra.mxu0 0
    %590 = vmatprep.subr.bf16.mxu0 0
    %591 = vmatpush1.bf16.msra.mxu0 0
    %592 = vmatprep.subr.bf16.mxu0 0
    %593 = vmatpush1.bf16.msra.mxu0 0
    %594 = vmatprep.subr.bf16.mxu0 0
    %595 = vmatpush1.bf16.msra.mxu0 0
    %596 = vmatprep.subr.bf16.mxu0 0
    %597 = vmatpush1.bf16.msra.mxu0 0
    %598 = vmatprep.subr.bf16.mxu0 0
    %599 = vmatpush1.bf16.msra.mxu0 0
    %600 = vmatprep.subr.bf16.mxu0 0
    %601 = vmatpush1.bf16.msra.mxu0 0
    %602 = vmatprep.subr.bf16.mxu0 0
    %603 = vmatpush1.bf16.msra.mxu0 0
    %604 = vmatprep.subr.bf16.mxu0 0
    %605 = vmatpush1.bf16.msra.mxu0 0
    %606 = vmatprep.subr.bf16.mxu0 0
    %607 = vmatpush1.bf16.msra.mxu0 0
    %608 = vmatprep.subr.bf16.mxu0 0
    %609 = vmatpush1.bf16.msra.mxu0 0
    %610 = vmatprep.subr.bf16.mxu0 0
    %611 = vmatpush1.bf16.msra.mxu0 0
    %612 = vmatprep.subr.bf16.mxu0 0
    %613 = vmatpush1.bf16.msra.mxu0 0
    %614 = vmatprep.subr.bf16.mxu0 0
    %615 = vmatpush1.bf16.msra.mxu0 0
    %616 = vmatprep.mubr.bf16.mxu0 0
    %617 = vmatmul.mubr.bf16.gmra.mrb[0].mxu0 %v462
    %v618 = vpop.f32.mrb[0].mxu0
    %v619 = vadd.f32 %v579, %v618
    %v620 = vpop.f32.mrb[0].mxu0
    %v621 = vpop.f32.mrb[0].mxu0
    %v622 = vpop.f32.mrb[0].mxu0
    %623 = vdwg.mxu0
    %v624 = vmax.f32 %v619, 0.0
    %v625 = vpack.c.bf16 %v624, %v624
    %v626 = vld [vmem:[%s3] sm:$0xf]
    %v627 = vld [vmem:[%s3 + $0x4] sm:$0xf]
    %v628 = vld [vmem:[%s3 + $0x8] sm:$0xf]
    %v629 = vld [vmem:[%s3 + $0xc] sm:$0xf]
    %v630 = vld [vmem:[%s3 + $0x10] sm:$0xf]
    %v631 = vld [vmem:[%s3 + $0x14] sm:$0xf]
    %v632 = vld [vmem:[%s3 + $0x18] sm:$0xf]
    %v633 = vld [vmem:[%s3 + $0x1c] sm:$0xf]
    %v634 = vld [vmem:[%s3 + $0x20] sm:$0xf]
    %v635 = vld [vmem:[%s3 + $0x24] sm:$0xf]
    %v636 = vld [vmem:[%s3 + $0x28] sm:$0xf]
    %v637 = vld [vmem:[%s3 + $0x2c] sm:$0xf]
    %v638 = vld [vmem:[%s3 + $0x30] sm:$0xf]
    %v639 = vld [vmem:[%s3 + $0x34] sm:$0xf]
    %v640 = vld [vmem:[%s3 + $0x38] sm:$0xf]
    %v641 = vld [vmem:[%s3 + $0x3c] sm:$0xf]
    %v642 = vld [vmem:[%s4] sm:$0x1]
    %v644 = vlaneseq
    %v645 = vshrl.u32 %v644, 7
    %v646 = vsub.s32 0, %v645
    %v647 = vrot.slane %v642, %v646
    %v665 = vunpack.c.l.b16 %v626
    %v666 = vunpack.c.l.b16 %v627
    %v667 = vunpack.c.l.b16 %v628
    %v668 = vunpack.c.l.b16 %v629
    %v669 = vunpack.c.l.b16 %v630
    %v670 = vunpack.c.l.b16 %v631
    %v671 = vunpack.c.l.b16 %v632
    %v672 = vunpack.c.l.b16 %v633
    %v673 = vunpack.c.l.b16 %v634
    %v674 = vunpack.c.l.b16 %v635
    %v675 = vunpack.c.l.b16 %v636
    %v676 = vunpack.c.l.b16 %v637
    %v677 = vunpack.c.l.b16 %v638
    %v678 = vunpack.c.l.b16 %v639
    %v679 = vunpack.c.l.b16 %v640
    %v680 = vunpack.c.l.b16 %v641
    %v681 = vpack.c.b16 %v666, %v665
    %v682 = vpack.c.b16 %v668, %v667
    %v683 = vpack.c.b16 %v670, %v669
    %v684 = vpack.c.b16 %v672, %v671
    %v685 = vpack.c.b16 %v674, %v673
    %v686 = vpack.c.b16 %v676, %v675
    %v687 = vpack.c.b16 %v678, %v677
    %v688 = vpack.c.b16 %v680, %v679
    %697 = vmatprep.subr.bf16.mxu0 0
    %698 = vmatpush1.bf16.msra.mxu0 %v681
    %699 = vmatprep.subr.bf16.mxu0 0
    %700 = vmatpush1.bf16.msra.mxu0 %v682
    %701 = vmatprep.subr.bf16.mxu0 0
    %702 = vmatpush1.bf16.msra.mxu0 %v683
    %703 = vmatprep.subr.bf16.mxu0 0
    %704 = vmatpush1.bf16.msra.mxu0 %v684
    %705 = vmatprep.subr.bf16.mxu0 0
    %706 = vmatpush1.bf16.msra.mxu0 %v685
    %707 = vmatprep.subr.bf16.mxu0 0
    %708 = vmatpush1.bf16.msra.mxu0 %v686
    %709 = vmatprep.subr.bf16.mxu0 0
    %710 = vmatpush1.bf16.msra.mxu0 %v687
    %711 = vmatprep.subr.bf16.mxu0 0
    %712 = vmatpush1.bf16.msra.mxu0 %v688
    %713 = vmatprep.subr.bf16.mxu0 0
    %714 = vmatpush1.bf16.msra.mxu0 0
    %715 = vmatprep.subr.bf16.mxu0 0
    %716 = vmatpush1.bf16.msra.mxu0 0
    %717 = vmatprep.subr.bf16.mxu0 0
    %718 = vmatpush1.bf16.msra.mxu0 0
    %719 = vmatprep.subr.bf16.mxu0 0
    %720 = vmatpush1.bf16.msra.mxu0 0
    %721 = vmatprep.subr.bf16.mxu0 0
    %722 = vmatpush1.bf16.msra.mxu0 0
    %723 = vmatprep.subr.bf16.mxu0 0
    %724 = vmatpush1.bf16.msra.mxu0 0
    %725 = vmatprep.subr.bf16.mxu0 0
    %726 = vmatpush1.bf16.msra.mxu0 0
    %727 = vmatprep.subr.bf16.mxu0 0
    %728 = vmatpush1.bf16.msra.mxu0 0
    %729 = vmatprep.mubr.bf16.mxu0 0
    %730 = vmatmul.mubr.bf16.gmra.mrb[0].mxu0 %v625
    %v731 = vpop.f32.mrb[0].mxu0
    %v732 = vadd.f32 %v647, %v731
    %v733 = vpop.f32.mrb[0].mxu0
    %v734 = vpop.f32.mrb[0].mxu0
    %v735 = vpop.f32.mrb[0].mxu0
    %736 = vdwg.mxu0
    %v737 = vmax.f32 %v732, 0.0
    %v738 = vpack.c.bf16 %v737, %v737
    %v739 = vld [vmem:[%s5] sm:$0xf]
    %v740 = vld [vmem:[%s5 + $0x4] sm:$0xf]
    %v741 = vld [vmem:[%s5 + $0x8] sm:$0xf]
    %v742 = vld [vmem:[%s5 + $0xc] sm:$0xf]
    %v743 = vld [vmem:[%s5 + $0x10] sm:$0xf]
    %v744 = vld [vmem:[%s5 + $0x14] sm:$0xf]
    %v745 = vld [vmem:[%s5 + $0x18] sm:$0xf]
    %v746 = vld [vmem:[%s5 + $0x1c] sm:$0xf]
    %v747 = vld [vmem:[%s6] sm:$0x1]
    %v749 = vlaneseq
    %v750 = vshrl.u32 %v749, 7
    %v751 = vsub.s32 0, %v750
    %v752 = vrot.slane %v747, %v751
    %v762 = vunpack.c.l.b16 %v739
    %v763 = vunpack.c.l.b16 %v740
    %v764 = vunpack.c.l.b16 %v741
    %v765 = vunpack.c.l.b16 %v742
    %v766 = vunpack.c.l.b16 %v743
    %v767 = vunpack.c.l.b16 %v744
    %v768 = vunpack.c.l.b16 %v745
    %v769 = vunpack.c.l.b16 %v746
    %v770 = vpack.c.b16 %v763, %v762
    %v771 = vpack.c.b16 %v765, %v764
    %v772 = vpack.c.b16 %v767, %v766
    %v773 = vpack.c.b16 %v769, %v768
    %vm778 = vcmask 523264
    %v780 = vsel %vm778, %v738, 0
    %782 = vmatprep.subr.bf16.mxu0 0
    %783 = vmatpush1.bf16.msra.mxu0 %v770
    %784 = vmatprep.subr.bf16.mxu0 0
    %785 = vmatpush1.bf16.msra.mxu0 %v771
    %786 = vmatprep.subr.bf16.mxu0 0
    %787 = vmatpush1.bf16.msra.mxu0 %v772
    %788 = vmatprep.subr.bf16.mxu0 0
    %789 = vmatpush1.bf16.msra.mxu0 %v773
    %790 = vmatprep.subr.bf16.mxu0 0
    %791 = vmatpush1.bf16.msra.mxu0 0
    %792 = vmatprep.subr.bf16.mxu0 0
    %793 = vmatpush1.bf16.msra.mxu0 0
    %794 = vmatprep.subr.bf16.mxu0 0
    %795 = vmatpush1.bf16.msra.mxu0 0
    %796 = vmatprep.subr.bf16.mxu0 0
    %797 = vmatpush1.bf16.msra.mxu0 0
    %798 = vmatprep.subr.bf16.mxu0 0
    %799 = vmatpush1.bf16.msra.mxu0 0
    %800 = vmatprep.subr.bf16.mxu0 0
    %801 = vmatpush1.bf16.msra.mxu0 0
    %802 = vmatprep.subr.bf16.mxu0 0
    %803 = vmatpush1.bf16.msra.mxu0 0
    %804 = vmatprep.subr.bf16.mxu0 0
    %805 = vmatpush1.bf16.msra.mxu0 0
    %806 = vmatprep.subr.bf16.mxu0 0
    %807 = vmatpush1.bf16.msra.mxu0 0
    %808 = vmatprep.subr.bf16.mxu0 0
    %809 = vmatpush1.bf16.msra.mxu0 0
    %810 = vmatprep.subr.bf16.mxu0 0
    %811 = vmatpush1.bf16.msra.mxu0 0
    %812 = vmatprep.subr.bf16.mxu0 0
    %813 = vmatpush1.bf16.msra.mxu0 0
    %814 = vmatprep.mubr.bf16.mxu0 0
    %815 = vmatmul.mubr.bf16.gmra.mrb[0].mxu0 %v780
    %v816 = vpop.f32.mrb[0].mxu0
    %v817 = vadd.f32 %v752, %v816
    %v818 = vpop.f32.mrb[0].mxu0
    %v819 = vpop.f32.mrb[0].mxu0
    %v820 = vpop.f32.mrb[0].mxu0
    %821 = vdwg.mxu0
    %v822 = vmax.f32 %v817, 0.0
    %v823 = vpack.c.bf16 %v822, %v822
    %v824 = vld [vmem:[%s7] sm:$0xf]
    %v825 = vld [vmem:[%s7 + $0x4] sm:$0xf]
    %v826 = vld [vmem:[%s7 + $0x8] sm:$0xf]
    %v827 = vld [vmem:[%s7 + $0xc] sm:$0xf]
    %v828 = vld [vmem:[%s8] sm:$0x1]
    %v830 = vlaneseq
    %v831 = vshrl.u32 %v830, 7
    %v832 = vsub.s32 0, %v831
    %v833 = vrot.slane %v828, %v832
    %v839 = vunpack.c.l.b16 %v824
    %v840 = vunpack.c.l.b16 %v825
    %v841 = vunpack.c.l.b16 %v826
    %v842 = vunpack.c.l.b16 %v827
    %v843 = vpack.c.b16 %v840, %v839
    %v844 = vpack.c.b16 %v842, %v841
    %vm847 = vcmask 261120
    %v849 = vsel %vm847, %v823, 0
    %851 = vmatprep.subr.bf16.mxu0 0
    %852 = vmatpush1.bf16.msra.mxu0 %v843
    %853 = vmatprep.subr.bf16.mxu0 0
    %854 = vmatpush1.bf16.msra.mxu0 %v844
    %855 = vmatprep.subr.bf16.mxu0 0
    %856 = vmatpush1.bf16.msra.mxu0 0
    %857 = vmatprep.subr.bf16.mxu0 0
    %858 = vmatpush1.bf16.msra.mxu0 0
    %859 = vmatprep.subr.bf16.mxu0 0
    %860 = vmatpush1.bf16.msra.mxu0 0
    %861 = vmatprep.subr.bf16.mxu0 0
    %862 = vmatpush1.bf16.msra.mxu0 0
    %863 = vmatprep.subr.bf16.mxu0 0
    %864 = vmatpush1.bf16.msra.mxu0 0
    %865 = vmatprep.subr.bf16.mxu0 0
    %866 = vmatpush1.bf16.msra.mxu0 0
    %867 = vmatprep.subr.bf16.mxu0 0
    %868 = vmatpush1.bf16.msra.mxu0 0
    %869 = vmatprep.subr.bf16.mxu0 0
    %870 = vmatpush1.bf16.msra.mxu0 0
    %871 = vmatprep.subr.bf16.mxu0 0
    %872 = vmatpush1.bf16.msra.mxu0 0
    %873 = vmatprep.subr.bf16.mxu0 0
    %874 = vmatpush1.bf16.msra.mxu0 0
    %875 = vmatprep.subr.bf16.mxu0 0
    %876 = vmatpush1.bf16.msra.mxu0 0
    %877 = vmatprep.subr.bf16.mxu0 0
    %878 = vmatpush1.bf16.msra.mxu0 0
    %879 = vmatprep.subr.bf16.mxu0 0
    %880 = vmatpush1.bf16.msra.mxu0 0
    %881 = vmatprep.subr.bf16.mxu0 0
    %882 = vmatpush1.bf16.msra.mxu0 0
    %883 = vmatprep.mubr.bf16.mxu0 0
    %884 = vmatmul.mubr.bf16.gmra.mrb[0].mxu0 %v849
    %v885 = vpop.f32.mrb[0].mxu0
    %v886 = vadd.f32 %v833, %v885
    %v887 = vpop.f32.mrb[0].mxu0
    %v888 = vpop.f32.mrb[0].mxu0
    %v889 = vpop.f32.mrb[0].mxu0
    %890 = vdwg.mxu0
    %891 = vmax.xlane.f32.xlu0 %v886
    %v892 = vpop.xlane.xlu0 %891
    %v893 = vsub.f32 %v886, %v892
    %v894 = vmul.f32 %v893, 1.442695
    %v895 = vpow.pop %v894
    %896 = vadd.xlane.f32.xlu0 %v895
    %v897 = vpop.xlane.xlu0 %896
    %v898 = vlog2.pop %v897
    %v899 = vmul.f32 %v898, 0.6931472
    %v900 = vsub.f32 %v893, %v899
    %v901 = vpack.c.bf16 %v900, %v900
    %902 = vst [vmem:[%s9] sm:$0xf] %v901
    // Predicated region
    $region42: #{classifier_forward.1} parent=1 // pred_check
      _
    $region43: #{classifier_forward.1} parent=1 // pred_check_branch
      %904 = sbr.rel (0) target = $region45
    $region44: #{classifier_forward.1} parent=1 // pred_region
      _
    $region45: #{classifier_forward.1} parent=1 // pred_fallthru
      _
    // Predicated region
    $region46: #{classifier_forward.1} parent=1 // pred_check
      _
    $region47: #{classifier_forward.1} parent=1 // pred_check_branch
      %906 = sbr.rel (0) target = $region49
    $region48: #{classifier_forward.1} parent=1 // pred_region
      _
    $region49: #{classifier_forward.1} parent=1 // pred_fallthru
      _
    %907 = vsyncpa [#allocation3], 1

</llo_original>
